<compile_context>
chip_gen: v6e
topology: v6e:2x2x1
jax: 0.10.0
libtpu: 0.0.40
codegen_flags: <defaults>
</compile_context>

<pallas_src>
import functools

import jax
import jax.numpy as jnp
from jax.experimental import pallas as pl
from jax.experimental.pallas import tpu as pltpu


def _round_up(x, m):
    return (x + m - 1) // m * m


# ---------------------------------------------------------------------------
# Kernel A: small-C layout, (W, C) folded onto the lane axis.
#   x_ref: (1, Hp, Wp*C)     resident input slab for one batch element
#   w_ref: (k*k, Wout*C)     per-tap weights, tiled along the packed lanes
#   b_ref: (1, Wout*C)       bias, tiled along the packed lanes
#   o_ref: (1, HT, Wout*C)   one H tile of the output
# ---------------------------------------------------------------------------
def _dw_kernel_packed(x_ref, w_ref, b_ref, o_ref, *, k, stride, dilation,
                      ht, w_out, c):
    lane = w_out * c
    row0 = pl.multiple_of(pl.program_id(1) * (ht * stride), ht * stride)

    acc = jnp.zeros((ht, lane), jnp.float32)       # 8 rows x lanes: in vregs
    for kh in range(k):                            # k*k static unrolled taps
        for kw in range(k):
            h0 = row0 + kh * dilation
            if stride == 1:
                # output col j, channel cc  <->  packed lane j*C + cc
                patch = x_ref[0, pl.ds(h0, ht), pl.ds(kw * dilation * c, lane)]
            else:
                # strided rows via pl.ds; W subsampling on the small row tile
                span = (w_out - 1) * stride + 1
                rows = x_ref[0, pl.ds(h0, ht, stride=stride),
                             pl.ds(kw * dilation * c, span * c)]
                rows = rows.reshape(ht, span, c)
                patch = jax.lax.slice(rows, (0, 0, 0), (ht, span, c),
                                      (1, stride, 1)).reshape(ht, lane)
            wrow = w_ref[pl.ds(kh * k + kw, 1), :]                 # (1, lane)
            acc = acc + patch.astype(jnp.float32) * wrow.astype(jnp.float32)
    acc = acc + b_ref[...].astype(jnp.float32)                     # broadcast
    o_ref[0] = acc.astype(o_ref.dtype)


# ---------------------------------------------------------------------------
# Kernel B: channels-on-lanes NHWC layout (used when C_out % 128 == 0).
#   x_ref: (1, Hp, Wp, C); w_ref: (k*k, C); b_ref: (1, C)
#   o_ref: (1, HT, Wout, C)
# ---------------------------------------------------------------------------
def _dw_kernel_channels(x_ref, w_ref, b_ref, o_ref, *, k, stride, dilation,
                        ht, w_out, c):
    row0 = pl.multiple_of(pl.program_id(1) * (ht * stride), ht * stride)

    acc = jnp.zeros((ht, w_out, c), jnp.float32)
    for kh in range(k):
        for kw in range(k):
            h0 = row0 + kh * dilation
            w0 = kw * dilation
            if stride == 1:
                patch = x_ref[0, pl.ds(h0, ht), pl.ds(w0, w_out), :]
            else:
                patch = x_ref[0, pl.ds(h0, ht, stride=stride),
                              pl.ds(w0, w_out, stride=stride), :]
            wrow = w_ref[pl.ds(kh * k + kw, 1), :]                 # (1, C)
            acc = acc + patch.astype(jnp.float32) * wrow.astype(jnp.float32)[None]
    acc = acc + b_ref[...].astype(jnp.float32)[None]               # (1,1,C)
    o_ref[0] = acc.astype(o_ref.dtype)


def depthwise_conv2d(x, weight, bias=None, *, stride=1, padding=0, dilation=1,
                     depth_multiplier=1):
    """x: (N, C_in, H, W); weight: (C_out, 1, k, k); bias: (C_out,) or None.

    Matches F.conv2d(x, weight, bias, stride, padding, dilation,
    groups=C_in).  Returns (N, C_out, H_out, W_out).
    """
    n, c_in, h, w = x.shape
    c_out, _, k, k2 = weight.shape
    assert k == k2 and c_out == c_in * depth_multiplier

    if bias is None:
        bias = jnp.zeros((c_out,), x.dtype)

    # ---- wrapper-side layout plumbing (glue, not compute) ------------------
    if depth_multiplier > 1:
        # output channel oc reads input channel oc // depth_multiplier
        x = jnp.repeat(x, depth_multiplier, axis=1)
    x = jnp.transpose(x, (0, 2, 3, 1))                     # NCHW -> NHWC

    h_out = (h + 2 * padding - dilation * (k - 1) - 1) // stride + 1
    w_out = (w + 2 * padding - dilation * (k - 1) - 1) // stride + 1

    # 8 output rows per grid step keeps the f32 accumulator (HT x Wout*C)
    # small enough to live in vregs; pad H_out up to a multiple of HT.
    ht = 8 if h_out > 8 else h_out
    h_out_p = _round_up(h_out, ht)
    n_h = h_out_p // ht
    hp = (h_out_p - 1) * stride + dilation * (k - 1) + 1   # input rows needed
    wp = w + 2 * padding

    pad_hi = padding + max(0, hp - (h + 2 * padding))
    x = jnp.pad(x, ((0, 0), (padding, pad_hi), (padding, padding), (0, 0)))
    if x.shape[1] > hp:
        x = x[:, :hp]                                      # drop unused rows

    w_taps = weight.reshape(c_out, k * k).T                # (k*k, C_out)
    b_row = bias.reshape(1, c_out)

    compiler_params = pltpu.CompilerParams(
        dimension_semantics=("parallel", "parallel"),
        vmem_limit_bytes=32 * 1024 * 1024)

    if c_out % 128 == 0:
        # ---- channels-on-lanes layout (lane-dense, zero padding) -----------
        kernel = functools.partial(_dw_kernel_channels, k=k, stride=stride,
                                   dilation=dilation, ht=ht, w_out=w_out,
                                   c=c_out)
        out = pl.pallas_call(
            kernel,
            out_shape=jax.ShapeDtypeStruct((n, h_out_p, w_out, c_out), x.dtype),
            grid=(n, n_h),
            in_specs=[
                # full slab per batch, DMA'd once (index constant along j)
                pl.BlockSpec((1, hp, wp, c_out), lambda i, j: (i, 0, 0, 0)),
                pl.BlockSpec((k * k, c_out), lambda i, j: (0, 0)),
                pl.BlockSpec((1, c_out), lambda i, j: (0, 0)),
            ],
            out_specs=pl.BlockSpec((1, ht, w_out, c_out),
                                   lambda i, j: (i, j, 0, 0)),
            compiler_params=compiler_params,
        )(x, w_taps, b_row)
        out = out[:, :h_out]
    else:
        # ---- small-C layout: fold (W, C) onto the lane axis ----------------
        lane_in, lane_out = wp * c_out, w_out * c_out
        x = x.reshape(n, hp, lane_in)
        w_lanes = jnp.tile(w_taps, (1, w_out))             # (k*k, Wout*C)
        b_lanes = jnp.tile(b_row, (1, w_out))              # (1,   Wout*C)
        kernel = functools.partial(_dw_kernel_packed, k=k, stride=stride,
                                   dilation=dilation, ht=ht, w_out=w_out,
                                   c=c_out)
        out = pl.pallas_call(
            kernel,
            out_shape=jax.ShapeDtypeStruct((n, h_out_p, lane_out), x.dtype),
            grid=(n, n_h),
            in_specs=[
                pl.BlockSpec((1, hp, lane_in), lambda i, j: (i, 0, 0)),
                pl.BlockSpec((k * k, lane_out), lambda i, j: (0, 0)),
                pl.BlockSpec((1, lane_out), lambda i, j: (0, 0)),
            ],
            out_specs=pl.BlockSpec((1, ht, lane_out), lambda i, j: (i, j, 0)),
            compiler_params=compiler_params,
        )(x, w_lanes, b_lanes)
        out = out[:, :h_out].reshape(n, h_out, w_out, c_out)

    # NHWC -> NCHW to match the PyTorch module (drop if consumer takes NHWC).
    return jnp.transpose(out, (0, 3, 1, 2))


def _reference(x, weight, bias, stride, padding, dilation, groups):
    out = jax.lax.conv_general_dilated(
        x, weight,
        window_strides=(stride, stride),
        padding=((padding, padding), (padding, padding)),
        rhs_dilation=(dilation, dilation),
        dimension_numbers=("NCHW", "OIHW", "NCHW"),
        feature_group_count=groups)
    return out + bias.reshape(1, -1, 1, 1)


if __name__ == "__main__":
    key = jax.random.PRNGKey(0)

    # -- main config: DepthwiseConv2D_mod(in_channels=4, kernel_size=3,
    #    stride=1, padding=1, bias=True, depth_multiplier=1) -----------------
    in_channels, k, stride, padding, dilation, dm = 4, 3, 1, 1, 1, 1
    out_channels = in_channels * dm
    kx, kw, key = jax.random.split(key, 3)
    fan_out = dm * k * k                # kaiming_normal_(mode='fan_out', relu)
    weight = (2.0 / fan_out) ** 0.5 * jax.random.normal(
        kw, (out_channels, 1, k, k), dtype=jnp.float32)
    bias = jnp.zeros((out_channels,), jnp.float32)     # init.constant_(bias, 0)
    x = jax.random.normal(kx, (2, in_channels, 16, 16), dtype=jnp.float32)

    out = depthwise_conv2d(x, weight, bias, stride=stride, padding=padding,
                           dilation=dilation, depth_multiplier=dm)
    out = jax.block_until_ready(out)
    ref = _reference(x, weight, bias, stride, padding, dilation, in_channels)
    assert out.shape == (2, out_channels, 16, 16)
    assert jnp.allclose(out, ref, atol=1e-4, rtol=1e-4)

    # -- secondary config exercising the channels-on-lanes path (C = 128) ----
    kx2, kw2, key = jax.random.split(key, 3)
    c2 = 128
    w2 = (2.0 / (k * k)) ** 0.5 * jax.random.normal(
        kw2, (c2, 1, k, k), dtype=jnp.float32)
    b2 = 0.1 * jnp.ones((c2,), jnp.float32)
    x2 = jax.random.normal(kx2, (1, c2, 8, 8), dtype=jnp.float32)
    out2 = jax.block_until_ready(
        depthwise_conv2d(x2, w2, b2, stride=1, padding=1))
    ref2 = _reference(x2, w2, b2, 1, 1, 1, c2)
    assert out2.shape == (1, c2, 8, 8)
    assert jnp.allclose(out2, ref2, atol=1e-4, rtol=1e-4)

    print("KERNEL_OK")
</pallas_src>

<mosaic_0001>
module attributes {stable_mosaic.version = 11 : i64} {
  func.func @_dw_kernel_packed(%arg0: i32, %arg1: i32, %arg2: memref<1x18x72xf32, #tpu.memory_space<vmem>>, %arg3: memref<9x64xf32, #tpu.memory_space<vmem>>, %arg4: memref<1x64xf32, #tpu.memory_space<vmem>>, %arg5: memref<1x8x64xf32, #tpu.memory_space<vmem>>) attributes {dimension_semantics = [#tpu.dimension_semantics<parallel>, #tpu.dimension_semantics<parallel>], iteration_bounds = array<i64: 2, 2>, scalar_prefetch = 0 : i64, scratch_operands = 0 : i64, tpu.core_type = #tpu.core_type<tc>, window_params = [{transform_indices = @transform_0, window_bounds = array<i64: 1, 18, 72>}, {pipeline_mode = #tpu.pipeline_mode<synchronous>, transform_indices = @transform_1, window_bounds = array<i64: 9, 64>}, {pipeline_mode = #tpu.pipeline_mode<synchronous>, transform_indices = @transform_2, window_bounds = array<i64: 1, 64>}, {transform_indices = @transform_3, window_bounds = array<i64: 1, 8, 64>}]} {
    %c8_i32 = arith.constant 8 : i32
    %0 = arith.muli %arg1, %c8_i32 : i32
    %1 = tpu.assume_multiple %0, 8 : i32
    %cst = arith.constant 0.000000e+00 : f32
    %2 = vector.broadcast %cst : f32 to vector<8x64xf32>
    %c0_i32 = arith.constant 0 : i32
    %3 = arith.addi %1, %c0_i32 : i32
    %c0 = arith.constant 0 : index
    %4 = arith.index_cast %3 : i32 to index
    %c0_0 = arith.constant 0 : index
    %5 = vector.load %arg2[%c0, %4, %c0_0] : memref<1x18x72xf32, #tpu.memory_space<vmem>>, vector<1x8x64xf32>
    %6 = vector.shape_cast %5 : vector<1x8x64xf32> to vector<8x64xf32>
    %c0_1 = arith.constant 0 : index
    %c0_2 = arith.constant 0 : index
    %7 = vector.load %arg3[%c0_1, %c0_2] : memref<9x64xf32, #tpu.memory_space<vmem>>, vector<1x64xf32>
    %8 = vector.broadcast %7 : vector<1x64xf32> to vector<8x64xf32>
    %9 = arith.mulf %6, %8 : vector<8x64xf32>
    %10 = arith.addf %2, %9 : vector<8x64xf32>
    %c0_i32_3 = arith.constant 0 : i32
    %11 = arith.addi %1, %c0_i32_3 : i32
    %c0_4 = arith.constant 0 : index
    %12 = arith.index_cast %11 : i32 to index
    %c4 = arith.constant 4 : index
    %13 = vector.load %arg2[%c0_4, %12, %c4] : memref<1x18x72xf32, #tpu.memory_space<vmem>>, vector<1x8x64xf32>
    %14 = vector.shape_cast %13 : vector<1x8x64xf32> to vector<8x64xf32>
    %c1 = arith.constant 1 : index
    %c0_5 = arith.constant 0 : index
    %15 = vector.load %arg3[%c1, %c0_5] : memref<9x64xf32, #tpu.memory_space<vmem>>, vector<1x64xf32>
    %16 = vector.broadcast %15 : vector<1x64xf32> to vector<8x64xf32>
    %17 = arith.mulf %14, %16 : vector<8x64xf32>
    %18 = arith.addf %10, %17 : vector<8x64xf32>
    %c0_i32_6 = arith.constant 0 : i32
    %19 = arith.addi %1, %c0_i32_6 : i32
    %c0_7 = arith.constant 0 : index
    %20 = arith.index_cast %19 : i32 to index
    %c8 = arith.constant 8 : index
    %21 = vector.load %arg2[%c0_7, %20, %c8] : memref<1x18x72xf32, #tpu.memory_space<vmem>>, vector<1x8x64xf32>
    %22 = vector.shape_cast %21 : vector<1x8x64xf32> to vector<8x64xf32>
    %c2 = arith.constant 2 : index
    %c0_8 = arith.constant 0 : index
    %23 = vector.load %arg3[%c2, %c0_8] : memref<9x64xf32, #tpu.memory_space<vmem>>, vector<1x64xf32>
    %24 = vector.broadcast %23 : vector<1x64xf32> to vector<8x64xf32>
    %25 = arith.mulf %22, %24 : vector<8x64xf32>
    %26 = arith.addf %18, %25 : vector<8x64xf32>
    %c1_i32 = arith.constant 1 : i32
    %27 = arith.addi %1, %c1_i32 : i32
    %c0_9 = arith.constant 0 : index
    %28 = arith.index_cast %27 : i32 to index
    %c0_10 = arith.constant 0 : index
    %29 = vector.load %arg2[%c0_9, %28, %c0_10] : memref<1x18x72xf32, #tpu.memory_space<vmem>>, vector<1x8x64xf32>
    %30 = vector.shape_cast %29 : vector<1x8x64xf32> to vector<8x64xf32>
    %c3 = arith.constant 3 : index
    %c0_11 = arith.constant 0 : index
    %31 = vector.load %arg3[%c3, %c0_11] : memref<9x64xf32, #tpu.memory_space<vmem>>, vector<1x64xf32>
    %32 = vector.broadcast %31 : vector<1x64xf32> to vector<8x64xf32>
    %33 = arith.mulf %30, %32 : vector<8x64xf32>
    %34 = arith.addf %26, %33 : vector<8x64xf32>
    %c1_i32_12 = arith.constant 1 : i32
    %35 = arith.addi %1, %c1_i32_12 : i32
    %c0_13 = arith.constant 0 : index
    %36 = arith.index_cast %35 : i32 to index
    %c4_14 = arith.constant 4 : index
    %37 = vector.load %arg2[%c0_13, %36, %c4_14] : memref<1x18x72xf32, #tpu.memory_space<vmem>>, vector<1x8x64xf32>
    %38 = vector.shape_cast %37 : vector<1x8x64xf32> to vector<8x64xf32>
    %c4_15 = arith.constant 4 : index
    %c0_16 = arith.constant 0 : index
    %39 = vector.load %arg3[%c4_15, %c0_16] : memref<9x64xf32, #tpu.memory_space<vmem>>, vector<1x64xf32>
    %40 = vector.broadcast %39 : vector<1x64xf32> to vector<8x64xf32>
    %41 = arith.mulf %38, %40 : vector<8x64xf32>
    %42 = arith.addf %34, %41 : vector<8x64xf32>
    %c1_i32_17 = arith.constant 1 : i32
    %43 = arith.addi %1, %c1_i32_17 : i32
    %c0_18 = arith.constant 0 : index
    %44 = arith.index_cast %43 : i32 to index
    %c8_19 = arith.constant 8 : index
    %45 = vector.load %arg2[%c0_18, %44, %c8_19] : memref<1x18x72xf32, #tpu.memory_space<vmem>>, vector<1x8x64xf32>
    %46 = vector.shape_cast %45 : vector<1x8x64xf32> to vector<8x64xf32>
    %c5 = arith.constant 5 : index
    %c0_20 = arith.constant 0 : index
    %47 = vector.load %arg3[%c5, %c0_20] : memref<9x64xf32, #tpu.memory_space<vmem>>, vector<1x64xf32>
    %48 = vector.broadcast %47 : vector<1x64xf32> to vector<8x64xf32>
    %49 = arith.mulf %46, %48 : vector<8x64xf32>
    %50 = arith.addf %42, %49 : vector<8x64xf32>
    %c2_i32 = arith.constant 2 : i32
    %51 = arith.addi %1, %c2_i32 : i32
    %c0_21 = arith.constant 0 : index
    %52 = arith.index_cast %51 : i32 to index
    %c0_22 = arith.constant 0 : index
    %53 = vector.load %arg2[%c0_21, %52, %c0_22] : memref<1x18x72xf32, #tpu.memory_space<vmem>>, vector<1x8x64xf32>
    %54 = vector.shape_cast %53 : vector<1x8x64xf32> to vector<8x64xf32>
    %c6 = arith.constant 6 : index
    %c0_23 = arith.constant 0 : index
    %55 = vector.load %arg3[%c6, %c0_23] : memref<9x64xf32, #tpu.memory_space<vmem>>, vector<1x64xf32>
    %56 = vector.broadcast %55 : vector<1x64xf32> to vector<8x64xf32>
    %57 = arith.mulf %54, %56 : vector<8x64xf32>
    %58 = arith.addf %50, %57 : vector<8x64xf32>
    %c2_i32_24 = arith.constant 2 : i32
    %59 = arith.addi %1, %c2_i32_24 : i32
    %c0_25 = arith.constant 0 : index
    %60 = arith.index_cast %59 : i32 to index
    %c4_26 = arith.constant 4 : index
    %61 = vector.load %arg2[%c0_25, %60, %c4_26] : memref<1x18x72xf32, #tpu.memory_space<vmem>>, vector<1x8x64xf32>
    %62 = vector.shape_cast %61 : vector<1x8x64xf32> to vector<8x64xf32>
    %c7 = arith.constant 7 : index
    %c0_27 = arith.constant 0 : index
    %63 = vector.load %arg3[%c7, %c0_27] : memref<9x64xf32, #tpu.memory_space<vmem>>, vector<1x64xf32>
    %64 = vector.broadcast %63 : vector<1x64xf32> to vector<8x64xf32>
    %65 = arith.mulf %62, %64 : vector<8x64xf32>
    %66 = arith.addf %58, %65 : vector<8x64xf32>
    %c2_i32_28 = arith.constant 2 : i32
    %67 = arith.addi %1, %c2_i32_28 : i32
    %c0_29 = arith.constant 0 : index
    %68 = arith.index_cast %67 : i32 to index
    %c8_30 = arith.constant 8 : index
    %69 = vector.load %arg2[%c0_29, %68, %c8_30] : memref<1x18x72xf32, #tpu.memory_space<vmem>>, vector<1x8x64xf32>
    %70 = vector.shape_cast %69 : vector<1x8x64xf32> to vector<8x64xf32>
    %c8_31 = arith.constant 8 : index
    %c0_32 = arith.constant 0 : index
    %71 = vector.load %arg3[%c8_31, %c0_32] : memref<9x64xf32, #tpu.memory_space<vmem>>, vector<1x64xf32>
    %72 = vector.broadcast %71 : vector<1x64xf32> to vector<8x64xf32>
    %73 = arith.mulf %70, %72 : vector<8x64xf32>
    %74 = arith.addf %66, %73 : vector<8x64xf32>
    %c0_33 = arith.constant 0 : index
    %c0_34 = arith.constant 0 : index
    %75 = vector.load %arg4[%c0_33, %c0_34] : memref<1x64xf32, #tpu.memory_space<vmem>>, vector<1x64xf32>
    %76 = vector.broadcast %75 : vector<1x64xf32> to vector<8x64xf32>
    %77 = arith.addf %74, %76 : vector<8x64xf32>
    %c0_35 = arith.constant 0 : index
    %c0_36 = arith.constant 0 : index
    %c0_37 = arith.constant 0 : index
    %78 = vector.load %arg5[%c0_35, %c0_36, %c0_37] : memref<1x8x64xf32, #tpu.memory_space<vmem>>, vector<1x8x64xf32>
    %79 = vector.shape_cast %78 : vector<1x8x64xf32> to vector<8x64xf32>
    %80 = vector.shape_cast %77 : vector<8x64xf32> to vector<1x8x64xf32>
    tpu.vector_store %arg5[%c0_35, %c0_36, %c0_37], %80 {strides = array<i32>} : memref<1x8x64xf32, #tpu.memory_space<vmem>>, vector<1x8x64xf32>,
    return
  }
  func.func @transform_0(%arg0: i32, %arg1: i32) -> (i32, i32, i32) {
    %c0_i32 = arith.constant 0 : i32
    %c0_i32_0 = arith.constant 0 : i32
    %c0_i32_1 = arith.constant 0 : i32
    return %arg0, %c0_i32, %c0_i32_0 : i32, i32, i32
  }
  func.func @transform_1(%arg0: i32, %arg1: i32) -> (i32, i32) {
    %c0_i32 = arith.constant 0 : i32
    %c0_i32_0 = arith.constant 0 : i32
    %c0_i32_1 = arith.constant 0 : i32
    return %c0_i32, %c0_i32_0 : i32, i32
  }
  func.func @transform_2(%arg0: i32, %arg1: i32) -> (i32, i32) {
    %c0_i32 = arith.constant 0 : i32
    %c0_i32_0 = arith.constant 0 : i32
    %c0_i32_1 = arith.constant 0 : i32
    return %c0_i32, %c0_i32_0 : i32, i32
  }
  func.func @transform_3(%arg0: i32, %arg1: i32) -> (i32, i32, i32) {
    %c0_i32 = arith.constant 0 : i32
    %c0_i32_0 = arith.constant 0 : i32
    return %arg0, %arg1, %c0_i32 : i32, i32, i32
  }
}

</mosaic_0001>

<llo_original>
// kernel: tpu_custom_call.1
$region0: #{tpu_custom_call.1}
  #allocation0 [shape = 'u32[]', space=smem, size = 0x4, offset = 0x4, fixed_abs, tag = 'smem constant byte address 0x4 - core index']
  #allocation1 [shape = 'u32[144,128]{1,0:T(1,128)}', space=vmem, size = 0x12000, scoped, tag = 'internal scratch']
  %s0 = inlined_call_operand.vmem [shape: f32[2,18,72], index: 0, kind: input, shape index: {}]
  %s1 = inlined_call_operand.vmem [shape: f32[9,64], index: 1, kind: input, shape index: {}]
  %s2 = inlined_call_operand.vmem [shape: f32[1,64], index: 2, kind: input, shape index: {}]
  %s3 = inlined_call_operand.hbm [shape: f32[2,16,64], index: 3, kind: output, shape index: {}]
  %s4 = sld [smem:[#allocation0]]
  $region45: #{tpu_custom_call.1} parent=0
    _
  %s6 = ssub.s32 1, %s4
  %s7 = scalar_select 0, %s6, %s4
  $region1: #{tpu_custom_call.1} parent=0
    #allocation2 [shape = 'u8[8192]{0}', space=vmem, size = 0x2000, scoped, tag = 'output window, operand 0']
    #allocation3 [shape = 's32[2]{0}', space=sflag, size = 0x8, scoped, tag = 'scoped memory for tpu_custom_call.1']
    %8 = vsyncpa [#allocation3], 0
    %s9 = scalar_lea.sflag [#allocation3], 1
    %10 = vsyncpa %s9, 0
    loop: start=0, step=1, limit=6
    $region2: #{tpu_custom_call.1} parent=1 // loop_pre_header
      _
    $region3: #{tpu_custom_call.1} parent=1 // loop_header
      %s12 = sphi 0, %s16
      %p13 = scmp.ge.s32.totalorder %s12, 6
      %s19 = sphi 0, %s31
      %s20 = sphi 0, %s27
      %s21 = sphi 0, %s19
      %s22 = sphi 0, %s20
      %s23 = sphi 0, %s21
      %s24 = sphi 0, %s22
      %s34 = sphi 0, %s36
      %s37 = sphi 0, %s34
      %s38 = sphi 0, %s37
      %s54 = sphi 0, %s38
      %s58 = sphi 0, %s58
      %s60 = sphi 0, %s58
      %s61 = sphi 0, %s60
      %s75 = sphi 0, %s61
      %s79 = sphi 0, %s79
      %s81 = sphi 0, %s79
      %s82 = sphi 0, %s81
      %s96 = sphi 0, %s82
      %s104 = sphi 0, %s106
      %s107 = sphi 0, %s104
      %s108 = sphi 0, %s107
      %s124 = sphi 0, %s108
    $region4: #{tpu_custom_call.1} parent=1 // loop_header_branch
      %15 = sbr.rel (%p13) target = $region8
    $region5: #{tpu_custom_call.1} parent=1 // loop_body
      %s17 = ssub.s32 %s12, 1
      %s18 = ssub.s32 %s12, 2
      %s25 = sadd.s32 1, %s20
      %p26 = scmp.ge.s32.totalorder %s25, 2
      %s27 = scalar_select %p26, 0, %s25
      %s28 = sadd.s32 1, %s19
      %s29 = scalar_select %p26, %s28, %s19
      %p30 = scmp.ge.s32.totalorder %s29, 2
      %s31 = scalar_select %p30, 0, %s29
      %s32 = ssub.s32 %s19, %s31
      %p33 = scmp.eq.s32.totalorder %s32, 0
      %s35 = sadd.s32 %s34, 1
      %s36 = scalar_select %p33, %s34, %s35
      %p39 = pneg %p33
      %p40 = scmp.eq.s32.totalorder %s12, 3
      %p41 = por %p39, %p40
      %p42 = scmp.ne.s32.totalorder %s34, %s37
      %p43 = scmp.eq.s32.totalorder %s12, 0
      %p44 = por %p42, %p43
      %p45 = scmp.ne.s32.totalorder %s34, %s37
      %p46 = scmp.eq.s32.totalorder %s17, 3
      %p47 = por %p45, %p46
      %p48 = scmp.ne.s32.totalorder %s37, %s38
      %p49 = scmp.eq.s32.totalorder %s17, 0
      %p50 = por %p48, %p49
      %p51 = scmp.ne.s32.totalorder %s37, %s38
      %p52 = scmp.eq.s32.totalorder %s18, 3
      %p53 = por %p51, %p52
      %p55 = scmp.ne.s32.totalorder %s38, %s54
      %p56 = scmp.eq.s32.totalorder %s18, 0
      %p57 = por %p55, %p56
      %s59 = sadd.s32 %s58, 1
      %p62 = scmp.eq.s32.totalorder %s12, 3
      %p63 = scmp.ne.s32.totalorder %s58, %s60
      %p64 = scmp.eq.s32.totalorder %s12, 0
      %p65 = por %p63, %p64
      %p66 = scmp.ne.s32.totalorder %s58, %s60
      %p67 = scmp.eq.s32.totalorder %s17, 3
      %p68 = por %p66, %p67
      %p69 = scmp.ne.s32.totalorder %s60, %s61
      %p70 = scmp.eq.s32.totalorder %s17, 0
      %p71 = por %p69, %p70
      %p72 = scmp.ne.s32.totalorder %s60, %s61
      %p73 = scmp.eq.s32.totalorder %s18, 3
      %p74 = por %p72, %p73
      %p76 = scmp.ne.s32.totalorder %s61, %s75
      %p77 = scmp.eq.s32.totalorder %s18, 0
      %p78 = por %p76, %p77
      %s80 = sadd.s32 %s79, 1
      %p83 = scmp.eq.s32.totalorder %s12, 3
      %p84 = scmp.ne.s32.totalorder %s79, %s81
      %p85 = scmp.eq.s32.totalorder %s12, 0
      %p86 = por %p84, %p85
      %p87 = scmp.ne.s32.totalorder %s79, %s81
      %p88 = scmp.eq.s32.totalorder %s17, 3
      %p89 = por %p87, %p88
      %p90 = scmp.ne.s32.totalorder %s81, %s82
      %p91 = scmp.eq.s32.totalorder %s17, 0
      %p92 = por %p90, %p91
      %p93 = scmp.ne.s32.totalorder %s81, %s82
      %p94 = scmp.eq.s32.totalorder %s18, 3
      %p95 = por %p93, %p94
      %p97 = scmp.ne.s32.totalorder %s82, %s96
      %p98 = scmp.eq.s32.totalorder %s18, 0
      %p99 = por %p97, %p98
      %s100 = ssub.s32 %s19, %s31
      %s101 = ssub.s32 %s20, %s27
      %s102 = sor.u32 %s100, %s101
      %p103 = scmp.eq.s32.totalorder %s102, 0
      %s105 = sadd.s32 %s104, 1
      %s106 = scalar_select %p103, %s104, %s105
      %p109 = pneg %p103
      %p110 = scmp.eq.s32.totalorder %s12, 3
      %p111 = por %p109, %p110
      %p112 = scmp.ne.s32.totalorder %s104, %s107
      %p113 = scmp.eq.s32.totalorder %s12, 0
      %p114 = por %p112, %p113
      %p115 = scmp.ne.s32.totalorder %s104, %s107
      %p116 = scmp.eq.s32.totalorder %s17, 3
      %p117 = por %p115, %p116
      %p118 = scmp.ne.s32.totalorder %s107, %s108
      %p119 = scmp.eq.s32.totalorder %s17, 0
      %p120 = por %p118, %p119
      %p121 = scmp.ne.s32.totalorder %s107, %s108
      %p122 = scmp.eq.s32.totalorder %s18, 3
      %p123 = por %p121, %p122
      %p125 = scmp.ne.s32.totalorder %s108, %s124
      %p126 = scmp.eq.s32.totalorder %s18, 0
      %p127 = por %p125, %p126
      %p128 = scmp.le.s32.totalorder 1, %s12
      %p129 = scmp.lt.s32.totalorder %s12, 5
      %p130 = pnand %p128, %p129
      %p131 = pneg %p130
      // Predicated region
      $region9: #{tpu_custom_call.1} parent=5 // pred_check
        _
      $region10: #{tpu_custom_call.1} parent=5 // pred_check_branch
        %133 = sbr.rel (%p130) target = $region12
      $region11: #{tpu_custom_call.1} parent=5 // pred_region
        %s134 = ssub.s32 %s12, 1
        // Predicated region
        $region13: #{tpu_custom_call.1} parent=11 // pred_check
          %p135 = pneg %p71
        $region14: #{tpu_custom_call.1} parent=11 // pred_check_branch
          %137 = sbr.rel (%p135) target = $region16
        $region15: #{tpu_custom_call.1} parent=11 // pred_region
          _
        $region16: #{tpu_custom_call.1} parent=11 // pred_fallthru
          _
        // Predicated region
        $region17: #{tpu_custom_call.1} parent=11 // pred_check
          %p138 = pneg %p92
        $region18: #{tpu_custom_call.1} parent=11 // pred_check_branch
          %140 = sbr.rel (%p138) target = $region20
        $region19: #{tpu_custom_call.1} parent=11 // pred_region
          _
        $region20: #{tpu_custom_call.1} parent=11 // pred_fallthru
          _
      $region12: #{tpu_custom_call.1} parent=5 // pred_fallthru
        _
      %p141 = scmp.lt.s32.totalorder %s12, 4
      // Predicated region
      $region21: #{tpu_custom_call.1} parent=5 // pred_check
        %p142 = pneg %p141
      $region22: #{tpu_custom_call.1} parent=5 // pred_check_branch
        %144 = sbr.rel (%p142) target = $region24
      $region23: #{tpu_custom_call.1} parent=5 // pred_region
        // Predicated region
        $region25: #{tpu_custom_call.1} parent=23 // pred_check
          %p145 = pneg %p44
        $region26: #{tpu_custom_call.1} parent=23 // pred_check_branch
          %147 = sbr.rel (%p145) target = $region28
        $region27: #{tpu_custom_call.1} parent=23 // pred_region
          %p148 = scmp.lt.s32.totalorder %s19, 1
          %s149 = scalar_select %p148, %s19, 1
          %s150 = smul.addr %s149, 3
          %s151 = smul.addr %s150, 8
          %s152 = scalar_lea.vmem %s0, %s151
        $region28: #{tpu_custom_call.1} parent=23 // pred_fallthru
          _
      $region24: #{tpu_custom_call.1} parent=5 // pred_fallthru
        _
      %p153 = scmp.le.s32.totalorder 1, %s12
      %p154 = scmp.lt.s32.totalorder %s12, 5
      %p155 = pnand %p153, %p154
      %p156 = pneg %p155
      // Predicated region
      $region29: #{tpu_custom_call.1} parent=5 // pred_check
        _
      $region30: #{tpu_custom_call.1} parent=5 // pred_check_branch
        %158 = sbr.rel (%p155) target = $region32
      $region31: #{tpu_custom_call.1} parent=5 // pred_region
        %s159 = ssub.s32 %s12, 1
        %p160 = scmp.lt.s32.totalorder %s21, 1
        %s161 = scalar_select %p160, %s21, 1
        %s162 = smul.addr %s161, 3
        %s163 = smul.addr %s162, 8
        %s164 = scalar_lea.vmem %s0, %s163
        %p165 = pneg %p50
        %p166 = pneg %p47
        %p167 = pneg %p71
        %p168 = pneg %p68
        %p169 = pneg %p92
        %p170 = pneg %p89
        %p171 = pneg %p120
        %p172 = pneg %p117
        %s173 = sand.u32 %s107, 1
        %s174 = scalar_lea.sflag [#allocation3], %s173
        %s175 = sand.u32 %s107, 1
        %s176 = smul.addr %s175, 8
        %s177 = scalar_lea.vmem [#allocation2], %s176
        %p178 = scmp.lt.s32.totalorder %s21, 1
        %s179 = scalar_select %p178, %s21, 1
        %s180 = smul.addr %s179, 3
        %s181 = smul.addr %s180, 8
        %s182 = scalar_lea.vmem %s0, %s181
        %s183 = smul.u32 %s22, 8
        %s184 = scalar_lea.vmem %s182, %s183
        %v185 = vld [vmem:[%s184] sm:$0xff]
        %v186 = vld [vmem:[%s1] sm:$0x1]
        %v187 = vlaneseq
        %v188 = vshrl.u32 %v187, 7
        %v189 = vsub.s32 0, %v188
        %v190 = vrot.slane %v186, %v189
        %v191 = vmul.f32 %v185, %v190
        %v192 = vadd.f32 %v191, 0.0
        %v193 = vld [vmem:[%s1 + $0x1] sm:$0x1]
        %v194 = vlaneseq
        %v195 = vshrl.u32 %v194, 7
        %v196 = vsub.s32 0, %v195
        %v197 = vrot.slane %v193, %v196
        %199 = vrot.lane.b32.xlu0 %v197, 4
        %v200 = vpop.permute.xlu0 %199
        %v202 = vmul.f32 %v185, %v200
        %204 = vrot.lane.b32.xlu0 %v202, 124
        %v205 = vpop.permute.xlu0 %204
        %v207 = vadd.f32 %v192, %v205
        %v208 = vld [vmem:[%s1 + $0x2] sm:$0x1]
        %v209 = vlaneseq
        %v210 = vshrl.u32 %v209, 7
        %v211 = vsub.s32 0, %v210
        %v212 = vrot.slane %v208, %v211
        %214 = vrot.lane.b32.xlu0 %v212, 8
        %v215 = vpop.permute.xlu0 %214
        %v217 = vmul.f32 %v185, %v215
        %219 = vrot.lane.b32.xlu0 %v217, 120
        %v220 = vpop.permute.xlu0 %219
        %v222 = vadd.f32 %v207, %v220
        %s223 = sadd.s32 %s183, 1
        %s224 = scalar_lea.vmem %s182, %s223
        %v225 = vld [vmem:[%s224] sm:$0xff]
        %v226 = vld [vmem:[%s1 + $0x3] sm:$0x1]
        %v227 = vlaneseq
        %v228 = vshrl.u32 %v227, 7
        %v229 = vsub.s32 0, %v228
        %v230 = vrot.slane %v226, %v229
        %v231 = vmul.f32 %v225, %v230
        %v232 = vadd.f32 %v222, %v231
        %v233 = vld [vmem:[%s1 + $0x4] sm:$0x1]
        %v234 = vlaneseq
        %v235 = vshrl.u32 %v234, 7
        %v236 = vsub.s32 0, %v235
        %v237 = vrot.slane %v233, %v236
        %239 = vrot.lane.b32.xlu0 %v237, 4
        %v240 = vpop.permute.xlu0 %239
        %v242 = vmul.f32 %v225, %v240
        %244 = vrot.lane.b32.xlu0 %v242, 124
        %v245 = vpop.permute.xlu0 %244
        %v247 = vadd.f32 %v232, %v245
        %v248 = vld [vmem:[%s1 + $0x5] sm:$0x1]
        %v249 = vlaneseq
        %v250 = vshrl.u32 %v249, 7
        %v251 = vsub.s32 0, %v250
        %v252 = vrot.slane %v248, %v251
        %254 = vrot.lane.b32.xlu0 %v252, 8
        %v255 = vpop.permute.xlu0 %254
        %v257 = vmul.f32 %v225, %v255
        %259 = vrot.lane.b32.xlu0 %v257, 120
        %v260 = vpop.permute.xlu0 %259
        %v262 = vadd.f32 %v247, %v260
        %s263 = sadd.s32 %s183, 2
        %s264 = scalar_lea.vmem %s182, %s263
        %v265 = vld [vmem:[%s264] sm:$0xff]
        %v266 = vld [vmem:[%s1 + $0x6] sm:$0x1]
        %v267 = vlaneseq
        %v268 = vshrl.u32 %v267, 7
        %v269 = vsub.s32 0, %v268
        %v270 = vrot.slane %v266, %v269
        %v271 = vmul.f32 %v265, %v270
        %v272 = vadd.f32 %v262, %v271
        %v273 = vld [vmem:[%s1 + $0x7] sm:$0x1]
        %v274 = vlaneseq
        %v275 = vshrl.u32 %v274, 7
        %v276 = vsub.s32 0, %v275
        %v277 = vrot.slane %v273, %v276
        %279 = vrot.lane.b32.xlu0 %v277, 4
        %v280 = vpop.permute.xlu0 %279
        %v282 = vmul.f32 %v265, %v280
        %284 = vrot.lane.b32.xlu0 %v282, 124
        %v285 = vpop.permute.xlu0 %284
        %v287 = vadd.f32 %v272, %v285
        %v288 = vld [vmem:[%s1 + $0x8] sm:$0x1]
        %v289 = vlaneseq
        %v290 = vshrl.u32 %v289, 7
        %v291 = vsub.s32 0, %v290
        %v292 = vrot.slane %v288, %v291
        %294 = vrot.lane.b32.xlu0 %v292, 8
        %v295 = vpop.permute.xlu0 %294
        %v297 = vmul.f32 %v265, %v295
        %299 = vrot.lane.b32.xlu0 %v297, 120
        %v300 = vpop.permute.xlu0 %299
        %v302 = vadd.f32 %v287, %v300
        %v303 = vld [vmem:[%s2] sm:$0x1]
        %v305 = vlaneseq
        %v306 = vshrl.u32 %v305, 7
        %v307 = vsub.s32 0, %v306
        %v308 = vrot.slane %v303, %v307
        %v310 = vadd.f32 %v302, %v308
        %vm311 = vcmask 523264
        %312 = vst.msk [vmem:[%s177] sm:$0xff] %vm311, %v310
        %s313 = sand.u32 %s107, 1
        %s314 = scalar_lea.sflag [#allocation3], %s313
        %s315 = sand.u32 %s107, 1
        %s316 = smul.addr %s315, 8
        %s317 = scalar_lea.vmem [#allocation2], %s316
        // Predicated region
        $region33: #{tpu_custom_call.1} parent=31 // pred_check
          %p318 = pneg %p117
        $region34: #{tpu_custom_call.1} parent=31 // pred_check_branch
          %320 = sbr.rel (%p318) target = $region36
        $region35: #{tpu_custom_call.1} parent=31 // pred_region
          %s322 = ssub.s32 128, 128
          %323 = vsyncadd %s314, %s322
          %s324 = smul.addr %s21, 2
          %s325 = sadd.s32 %s22, %s324
          %s326 = smul.addr %s325, 128
          %s327 = scalar_lea.hbm %s3, %s326
          %s329 = sshll.u32 %s317, 4
          %s330 = int_to_ptr.vmem [resolvable:$true] %s329
          %332 = dma.vmem_to_hbm [thread:$0]  %s330, 128, %s327, %s314
        $region36: #{tpu_custom_call.1} parent=31 // pred_fallthru
          _
      $region32: #{tpu_custom_call.1} parent=5 // pred_fallthru
        _
      %p333 = scmp.le.s32.totalorder 2, %s12
      // Predicated region
      $region37: #{tpu_custom_call.1} parent=5 // pred_check
        %p334 = pneg %p333
      $region38: #{tpu_custom_call.1} parent=5 // pred_check_branch
        %336 = sbr.rel (%p334) target = $region40
      $region39: #{tpu_custom_call.1} parent=5 // pred_region
        %s337 = ssub.s32 %s12, 2
        // Predicated region
        $region41: #{tpu_custom_call.1} parent=39 // pred_check
          %p338 = pneg %p123
        $region42: #{tpu_custom_call.1} parent=39 // pred_check_branch
          %340 = sbr.rel (%p338) target = $region44
        $region43: #{tpu_custom_call.1} parent=39 // pred_region
          %s341 = sand.u32 %s108, 1
          %s342 = scalar_lea.sflag [#allocation3], %s341
          %s343 = sand.u32 %s108, 1
          %s344 = smul.addr %s343, 8
          %s345 = scalar_lea.vmem [#allocation2], %s344
          %346 = dma.done %s342, 128
        $region44: #{tpu_custom_call.1} parent=39 // pred_fallthru
          _
      $region40: #{tpu_custom_call.1} parent=5 // pred_fallthru
        _
    $region6: #{tpu_custom_call.1} parent=1 // loop_footer
      %s16 = sadd.s32 1, %s12
    $region7: #{tpu_custom_call.1} parent=1 // loop_footer_branch
      %11 = sbr.rel target = $region3
    $region8: #{tpu_custom_call.1} parent=1 // loop_exit
      _
    %347 = vsyncpa [#allocation3], 1
    %s348 = scalar_lea.sflag [#allocation3], 1
    %349 = vsyncpa %s348, 1

</llo_original>
